<compile_context>
chip_gen: v5e
topology: v5e:2x2
jax: 0.10.0
libtpu: 0.0.40
codegen_flags: <defaults>
</compile_context>

<pallas_src>
import functools

import jax
import jax.numpy as jnp
from jax.experimental import pallas as pl
from jax.experimental.pallas import tpu as pltpu


def _round_up(x, m):
    return (x + m - 1) // m * m


def _tiles(n):
    """Return (tm, tk, n_pad): dst tile, src tile, padded node count.

    Small graphs use a single full-extent tile; large graphs use 256x512 bf16
    A tiles (256 KiB x 2 bufs per operand), which fits v7x's 32 MiB scoped /
    64 MiB physical VMEM with room for the Hp tile and the f32 accumulator.
    """
    if n <= 512:
        p = _round_up(n, 8)
        return p, p, p
    return 256, 512, _round_up(n, 512)


# -------------------------------------------------------------- projection --
def _proj_kernel(x_ref, wt_ref, o_ref):
    o_ref[...] = jnp.dot(x_ref[...], wt_ref[...],
                         preferred_element_type=jnp.float32).astype(o_ref.dtype)


def project(x, w_t, *, row_tile):
    """y = x @ w_t  (bf16 in, bf16 out, lane-dense padded columns)."""
    n, f = x.shape
    cpad = w_t.shape[1]
    return pl.pallas_call(
        _proj_kernel,
        out_shape=jax.ShapeDtypeStruct((n, cpad), jnp.bfloat16),
        grid=(n // row_tile,),
        in_specs=[pl.BlockSpec((row_tile, f), lambda i: (i, 0)),
                  pl.BlockSpec((f, cpad), lambda i: (0, 0))],
        out_specs=pl.BlockSpec((row_tile, cpad), lambda i: (i, 0)),
        compiler_params=pltpu.CompilerParams(
            dimension_semantics=("parallel",)),
    )(x, w_t)


# --------------------------------------------------------------- GCN layer --
def _gcn_kernel(a_ref, hp_ref, c_ref, relproj_ref, b_ref, *rest,
                apply_relu, project_next):
    if project_next:
        wnext_ref, o_ref, acc_ref = rest
    else:
        o_ref, acc_ref = rest

    k = pl.program_id(1)

    @pl.when(k == 0)
    def _init():
        # relation term + bias (tiny) seeds the accumulator.
        acc_ref[...] = (jnp.dot(c_ref[...], relproj_ref[...],
                                preferred_element_type=jnp.float32)
                        + b_ref[...])

    # main N^2 contraction (bf16 MXU, f32 accumulate):  acc += A_ik @ Hp_k
    acc_ref[...] += jnp.dot(a_ref[...], hp_ref[...],
                            preferred_element_type=jnp.float32)

    @pl.when(k == pl.num_programs(1) - 1)
    def _finish():
        h = acc_ref[...]
        if apply_relu:
            h = jnp.maximum(h, 0.0)
        if project_next:
            # Fuse the NEXT layer's input projection into this epilogue so the
            # intermediate activation hits HBM already at the next layer width.
            h = jnp.dot(h.astype(jnp.bfloat16), wnext_ref[...],
                        preferred_element_type=jnp.float32)
        o_ref[...] = h.astype(o_ref.dtype)


def gcn_layer(a, hp, c, relproj, b, *, tm, tk, w_next=None,
              apply_relu=False, out_dtype=jnp.float32):
    n_dst, n_src = a.shape
    nr_pad = c.shape[1]
    acc_cols = relproj.shape[1]
    out_cols = w_next.shape[1] if w_next is not None else acc_cols

    kernel = functools.partial(_gcn_kernel, apply_relu=apply_relu,
                               project_next=w_next is not None)

    in_specs = [
        pl.BlockSpec((tm, tk), lambda i, k: (i, k)),              # A tile
        pl.BlockSpec((tk, acc_cols), lambda i, k: (k, 0)),        # Hp tile
        pl.BlockSpec((tm, nr_pad), lambda i, k: (i, 0)),          # C tile
        pl.BlockSpec((nr_pad, acc_cols), lambda i, k: (0, 0)),    # W_rel @ W^T
        pl.BlockSpec((1, acc_cols), lambda i, k: (0, 0)),         # bias
    ]
    args = [a, hp, c, relproj, b]
    if w_next is not None:
        in_specs.append(pl.BlockSpec((acc_cols, out_cols), lambda i, k: (0, 0)))
        args.append(w_next)

    return pl.pallas_call(
        kernel,
        out_shape=jax.ShapeDtypeStruct((n_dst, out_cols), out_dtype),
        grid_spec=pltpu.PrefetchScalarGridSpec(
            num_scalar_prefetch=0,
            grid=(n_dst // tm, n_src // tk),
            in_specs=in_specs,
            out_specs=pl.BlockSpec((tm, out_cols), lambda i, k: (i, 0)),
            scratch_shapes=[pltpu.VMEM((tm, acc_cols), jnp.float32)]),
        compiler_params=pltpu.CompilerParams(
            dimension_semantics=("parallel", "arbitrary")),
    )(*args)


# -------------------------------------------------------- params / graph prep
def init_params(key, input_size, hidden_size, output_size, num_rel):
    ks = jax.random.split(key, 6)

    def lin_init(kw, kb, in_f, out_f):
        bound = 1.0 / jnp.sqrt(float(in_f))
        w = jax.random.uniform(kw, (out_f, in_f), jnp.float32, -bound, bound)
        b = jax.random.uniform(kb, (out_f,), jnp.float32, -bound, bound)
        return w, b

    w_rel1 = jax.random.normal(ks[0], (num_rel, input_size), jnp.float32) * 0.1
    w_lin1, b1 = lin_init(ks[1], ks[2], input_size, hidden_size)
    w_rel2 = jax.random.normal(ks[3], (num_rel, hidden_size), jnp.float32) * 0.1
    w_lin2, b2 = lin_init(ks[4], ks[5], hidden_size, output_size)
    return dict(w_rel1=w_rel1, w_lin1=w_lin1, b1=b1,
                w_rel2=w_rel2, w_lin2=w_lin2, b2=b2)


def prepare_params(params, num_rel):
    """One-time parameter algebra (hoisted out of the kernels): pre-transpose
    the linears, reassociate the relation term (W_rel @ W^T), zero-pad every
    channel dim to a multiple of 128 (lane-dense), cast MXU operands to bf16."""
    w_lin1, b1 = params["w_lin1"], params["b1"]
    w_lin2, b2 = params["w_lin2"], params["b2"]
    in_f, hidden = w_lin1.shape[1], w_lin1.shape[0]
    out = w_lin2.shape[0]
    hpad = _round_up(hidden, 128)
    opad = _round_up(out, 128)
    nrpad = _round_up(num_rel, 128)

    def pad2(x, r, c):
        return jnp.zeros((r, c), jnp.float32).at[:x.shape[0], :x.shape[1]].set(x)

    return dict(
        w1t=pad2(w_lin1.T, in_f, hpad).astype(jnp.bfloat16),      # (F, Hpad)
        w2t=pad2(w_lin2.T, hpad, opad).astype(jnp.bfloat16),      # (Hpad, Opad)
        relproj1=pad2(params["w_rel1"] @ w_lin1.T, nrpad, hpad),  # (NRpad, Hpad)
        relproj2=pad2(params["w_rel2"] @ w_lin2.T, nrpad, opad),  # (NRpad, Opad)
        b1=pad2(b1.reshape(1, -1), 1, hpad),
        b2=pad2(b2.reshape(1, -1), 1, opad),
    )


def build_graph_mats(src, dst, rel, num_rel, n_pad):
    """Densify the edge list: A[v,u] = #edges u->v, C[v,r] = #incoming rel-r
    edges at v.  Padded node rows/cols stay zero, so they never leak."""
    nrpad = _round_up(num_rel, 128)
    a = jnp.zeros((n_pad, n_pad), jnp.float32).at[dst, src].add(1.0)
    c = jnp.zeros((n_pad, nrpad), jnp.float32).at[dst, rel].add(1.0)
    return a, c


# ------------------------------------------------------------------ forward --
@functools.partial(jax.jit,
                   static_argnames=("n_nodes", "output_size", "tm", "tk"))
def net_forward(prep, a, c, feature_pad, *, n_nodes, output_size, tm, tk):
    # Hp0 = X @ W1^T                                 (Pallas proj kernel, bf16)
    hp0 = project(feature_pad, prep["w1t"], row_tile=tk)
    # H1p = relu(A @ Hp0 + C @ R1 + b1) @ W2^T       (layer 1, epilogue-fused)
    h1p = gcn_layer(a, hp0, c, prep["relproj1"], prep["b1"],
                    tm=tm, tk=tk, w_next=prep["w2t"], apply_relu=True,
                    out_dtype=jnp.bfloat16)
    # X2  = A @ H1p + C @ R2 + b2                    (layer 2)
    x2 = gcn_layer(a, h1p, c, prep["relproj2"], prep["b2"],
                   tm=tm, tk=tk, w_next=None, apply_relu=False,
                   out_dtype=jnp.float32)
    x = x2[:n_nodes, :output_size]
    g_emb = jnp.mean(x, axis=0)        # graph-level embedding (tiny reduce)
    return x, g_emb


# -------------------------------------------------------- pure-JAX reference --
def reference_forward(a_f32, c_f32, feature, params, n_nodes, num_rel):
    A = a_f32[:n_nodes, :n_nodes]
    C = c_f32[:n_nodes, :num_rel]
    h = A @ feature + C @ params["w_rel1"]
    h = jnp.maximum(h @ params["w_lin1"].T + params["b1"], 0.0)
    h = A @ h + C @ params["w_rel2"]
    x = h @ params["w_lin2"].T + params["b2"]
    return x, jnp.mean(x, axis=0)


if __name__ == "__main__":
    key = jax.random.PRNGKey(0)
    k_feat, k_src, k_dst, k_rel, k_par = jax.random.split(key, 5)

    # small shapes consistent with the module (num_rel=34 is hardcoded in GCN)
    N, E = 8, 24
    input_size, hidden_size, output_size, num_rel = 32, 32, 8, 34

    tm, tk, n_pad = _tiles(N)

    feature = jax.random.normal(k_feat, (N, input_size), jnp.float32)
    src = jax.random.randint(k_src, (E,), 0, N)
    dst = jax.random.randint(k_dst, (E,), 0, N)
    rel = jax.random.randint(k_rel, (E,), 0, num_rel)

    a_f32, c = build_graph_mats(src, dst, rel, num_rel, n_pad)
    # bf16 is exact for edge multiplicities < 256
    assert float(jnp.max(a_f32)) < 256.0
    a = a_f32.astype(jnp.bfloat16)

    feat_pad = jnp.zeros((n_pad, input_size), jnp.bfloat16).at[:N].set(
        feature.astype(jnp.bfloat16))

    params = init_params(k_par, input_size, hidden_size, output_size, num_rel)
    prep = prepare_params(params, num_rel)

    x, g_emb = net_forward(prep, a, c, feat_pad,
                           n_nodes=N, output_size=output_size, tm=tm, tk=tk)
    jax.block_until_ready((x, g_emb))
    assert x.shape == (N, output_size) and g_emb.shape == (output_size,)

    # correctness vs. f32 pure-JAX reference (bf16 MXU operands -> loose tol)
    x_ref, g_ref = reference_forward(a_f32, c, feature, params, N, num_rel)
    scale = float(jnp.max(jnp.abs(x_ref))) + 1.0
    assert float(jnp.max(jnp.abs(x - x_ref))) <= 1e-1 + 5e-2 * scale
    assert float(jnp.max(jnp.abs(g_emb - g_ref))) <= 1e-1 + 5e-2 * scale

    print("KERNEL_OK")
</pallas_src>

<mosaic_0001>
module attributes {stable_mosaic.version = 11 : i64} {
  func.func @_proj_kernel(%arg0: i32, %arg1: memref<8x32xbf16, #tpu.memory_space<vmem>>, %arg2: memref<32x128xbf16, #tpu.memory_space<vmem>>, %arg3: memref<8x128xbf16, #tpu.memory_space<vmem>>) attributes {dimension_semantics = [#tpu.dimension_semantics<parallel>], iteration_bounds = array<i64: 1>, scalar_prefetch = 0 : i64, scratch_operands = 0 : i64, tpu.core_type = #tpu.core_type<tc>, window_params = [{transform_indices = @transform_0, window_bounds = array<i64: 8, 32>}, {pipeline_mode = #tpu.pipeline_mode<synchronous>, transform_indices = @transform_1, window_bounds = array<i64: 32, 128>}, {transform_indices = @transform_2, window_bounds = array<i64: 8, 128>}]} {
    %c0 = arith.constant 0 : index
    %c0_0 = arith.constant 0 : index
    %0 = vector.load %arg1[%c0, %c0_0] : memref<8x32xbf16, #tpu.memory_space<vmem>>, vector<8x32xbf16>
    %c0_1 = arith.constant 0 : index
    %c0_2 = arith.constant 0 : index
    %1 = vector.load %arg2[%c0_1, %c0_2] : memref<32x128xbf16, #tpu.memory_space<vmem>>, vector<32x128xbf16>
    %cst = arith.constant dense<0.000000e+00> : vector<8x128xf32>
    %2 = tpu.matmul %0, %1, %cst {dimension_numbers = #tpu.dot_dimension_numbers<[1], [0], [0], [1], [0, 0, 1, 1], [], []>} : vector<8x32xbf16>, vector<32x128xbf16>, vector<8x128xf32> -> vector<8x128xf32>
    %3 = arith.truncf %2 : vector<8x128xf32> to vector<8x128xbf16>
    %c0_3 = arith.constant 0 : index
    %c0_4 = arith.constant 0 : index
    %4 = vector.load %arg3[%c0_3, %c0_4] : memref<8x128xbf16, #tpu.memory_space<vmem>>, vector<8x128xbf16>
    tpu.vector_store %arg3[%c0_3, %c0_4], %3 {strides = array<i32>} : memref<8x128xbf16, #tpu.memory_space<vmem>>, vector<8x128xbf16>,
    return
  }
  func.func @transform_0(%arg0: i32) -> (i32, i32) {
    %c0_i32 = arith.constant 0 : i32
    %c0_i32_0 = arith.constant 0 : i32
    return %arg0, %c0_i32 : i32, i32
  }
  func.func @transform_1(%arg0: i32) -> (i32, i32) {
    %c0_i32 = arith.constant 0 : i32
    %c0_i32_0 = arith.constant 0 : i32
    %c0_i32_1 = arith.constant 0 : i32
    return %c0_i32, %c0_i32_0 : i32, i32
  }
  func.func @transform_2(%arg0: i32) -> (i32, i32) {
    %c0_i32 = arith.constant 0 : i32
    %c0_i32_0 = arith.constant 0 : i32
    return %arg0, %c0_i32 : i32, i32
  }
}

module attributes {stable_mosaic.version = 11 : i64} {
  func.func @_gcn_kernel(%arg0: i32, %arg1: i32, %arg2: memref<8x8xbf16, #tpu.memory_space<vmem>>, %arg3: memref<8x128xbf16, #tpu.memory_space<vmem>>, %arg4: memref<8x128xf32, #tpu.memory_space<vmem>>, %arg5: memref<128x128xf32, #tpu.memory_space<vmem>>, %arg6: memref<1x128xf32, #tpu.memory_space<vmem>>, %arg7: memref<128x128xbf16, #tpu.memory_space<vmem>>, %arg8: memref<8x128xbf16, #tpu.memory_space<vmem>>, %arg9: memref<8x128xf32, #tpu.memory_space<vmem>>) attributes {dimension_semantics = [#tpu.dimension_semantics<parallel>, #tpu.dimension_semantics<arbitrary>], iteration_bounds = array<i64: 1, 1>, scalar_prefetch = 0 : i64, scratch_operands = 1 : i64, tpu.core_type = #tpu.core_type<tc>, window_params = [{transform_indices = @transform_0, window_bounds = array<i64: 8, 8>}, {transform_indices = @transform_1, window_bounds = array<i64: 8, 128>}, {transform_indices = @transform_2, window_bounds = array<i64: 8, 128>}, {pipeline_mode = #tpu.pipeline_mode<synchronous>, transform_indices = @transform_3, window_bounds = array<i64: 128, 128>}, {pipeline_mode = #tpu.pipeline_mode<synchronous>, transform_indices = @transform_4, window_bounds = array<i64: 1, 128>}, {pipeline_mode = #tpu.pipeline_mode<synchronous>, transform_indices = @transform_5, window_bounds = array<i64: 128, 128>}, {transform_indices = @transform_6, window_bounds = array<i64: 8, 128>}]} {
    %c0_i32 = arith.constant 0 : i32
    %0 = arith.cmpi eq, %arg1, %c0_i32 : i32
    %1 = arith.extui %0 : i1 to i32
    %c0_i32_0 = arith.constant 0 : i32
    %2 = arith.cmpi ne, %1, %c0_i32_0 : i32
    scf.if %2 {
      %c0_10 = arith.constant 0 : index
      %c0_11 = arith.constant 0 : index
      %12 = vector.load %arg4[%c0_10, %c0_11] : memref<8x128xf32, #tpu.memory_space<vmem>>, vector<8x128xf32>
      %c0_12 = arith.constant 0 : index
      %c0_13 = arith.constant 0 : index
      %13 = vector.load %arg5[%c0_12, %c0_13] : memref<128x128xf32, #tpu.memory_space<vmem>>, vector<128x128xf32>
      %cst_14 = arith.constant dense<0.000000e+00> : vector<8x128xf32>
      %14 = tpu.matmul %12, %13, %cst_14 {dimension_numbers = #tpu.dot_dimension_numbers<[1], [0], [0], [1], [0, 0, 1, 1], [], []>} : vector<8x128xf32>, vector<128x128xf32>, vector<8x128xf32> -> vector<8x128xf32>
      %c0_15 = arith.constant 0 : index
      %c0_16 = arith.constant 0 : index
      %15 = vector.load %arg6[%c0_15, %c0_16] : memref<1x128xf32, #tpu.memory_space<vmem>>, vector<1x128xf32>
      %16 = vector.broadcast %15 : vector<1x128xf32> to vector<8x128xf32>
      %17 = arith.addf %14, %16 : vector<8x128xf32>
      %c0_17 = arith.constant 0 : index
      %c0_18 = arith.constant 0 : index
      %18 = vector.load %arg9[%c0_17, %c0_18] : memref<8x128xf32, #tpu.memory_space<vmem>>, vector<8x128xf32>
      tpu.vector_store %arg9[%c0_17, %c0_18], %17 {strides = array<i32>} : memref<8x128xf32, #tpu.memory_space<vmem>>, vector<8x128xf32>,
    } else {
    }
    %c0 = arith.constant 0 : index
    %c0_1 = arith.constant 0 : index
    %3 = vector.load %arg9[%c0, %c0_1] : memref<8x128xf32, #tpu.memory_space<vmem>>, vector<8x128xf32>
    %c0_2 = arith.constant 0 : index
    %c0_3 = arith.constant 0 : index
    %4 = vector.load %arg2[%c0_2, %c0_3] : memref<8x8xbf16, #tpu.memory_space<vmem>>, vector<8x8xbf16>
    %c0_4 = arith.constant 0 : index
    %c0_5 = arith.constant 0 : index
    %5 = vector.load %arg3[%c0_4, %c0_5] : memref<8x128xbf16, #tpu.memory_space<vmem>>, vector<8x128xbf16>
    %cst = arith.constant dense<0.000000e+00> : vector<8x128xf32>
    %6 = tpu.matmul %4, %5, %cst {dimension_numbers = #tpu.dot_dimension_numbers<[1], [0], [0], [1], [0, 0, 1, 1], [], []>} : vector<8x8xbf16>, vector<8x128xbf16>, vector<8x128xf32> -> vector<8x128xf32>
    %7 = arith.addf %3, %6 : vector<8x128xf32>
    %c0_6 = arith.constant 0 : index
    %c0_7 = arith.constant 0 : index
    %8 = vector.load %arg9[%c0_6, %c0_7] : memref<8x128xf32, #tpu.memory_space<vmem>>, vector<8x128xf32>
    tpu.vector_store %arg9[%c0_6, %c0_7], %7 {strides = array<i32>} : memref<8x128xf32, #tpu.memory_space<vmem>>, vector<8x128xf32>,
    %c0_i32_8 = arith.constant 0 : i32
    %9 = arith.cmpi eq, %arg1, %c0_i32_8 : i32
    %10 = arith.extui %9 : i1 to i32
    %c0_i32_9 = arith.constant 0 : i32
    %11 = arith.cmpi ne, %10, %c0_i32_9 : i32
    scf.if %11 {
      %c0_10 = arith.constant 0 : index
      %c0_11 = arith.constant 0 : index
      %12 = vector.load %arg9[%c0_10, %c0_11] : memref<8x128xf32, #tpu.memory_space<vmem>>, vector<8x128xf32>
      %cst_12 = arith.constant 0.000000e+00 : f32
      %13 = vector.broadcast %cst_12 : f32 to vector<8x128xf32>
      %14 = arith.maximumf %12, %13 : vector<8x128xf32>
      %15 = arith.truncf %14 : vector<8x128xf32> to vector<8x128xbf16>
      %c0_13 = arith.constant 0 : index
      %c0_14 = arith.constant 0 : index
      %16 = vector.load %arg7[%c0_13, %c0_14] : memref<128x128xbf16, #tpu.memory_space<vmem>>, vector<128x128xbf16>
      %cst_15 = arith.constant dense<0.000000e+00> : vector<8x128xf32>
      %17 = tpu.matmul %15, %16, %cst_15 {dimension_numbers = #tpu.dot_dimension_numbers<[1], [0], [0], [1], [0, 0, 1, 1], [], []>} : vector<8x128xbf16>, vector<128x128xbf16>, vector<8x128xf32> -> vector<8x128xf32>
      %18 = arith.truncf %17 : vector<8x128xf32> to vector<8x128xbf16>
      %c0_16 = arith.constant 0 : index
      %c0_17 = arith.constant 0 : index
      %19 = vector.load %arg8[%c0_16, %c0_17] : memref<8x128xbf16, #tpu.memory_space<vmem>>, vector<8x128xbf16>
      tpu.vector_store %arg8[%c0_16, %c0_17], %18 {strides = array<i32>} : memref<8x128xbf16, #tpu.memory_space<vmem>>, vector<8x128xbf16>,
    } else {
    }
    return
  }
  func.func @transform_0(%arg0: i32, %arg1: i32) -> (i32, i32) {
    %c0_i32 = arith.constant 0 : i32
    return %arg0, %arg1 : i32, i32
  }
  func.func @transform_1(%arg0: i32, %arg1: i32) -> (i32, i32) {
    %c0_i32 = arith.constant 0 : i32
    %c0_i32_0 = arith.constant 0 : i32
    return %arg1, %c0_i32 : i32, i32
  }
  func.func @transform_2(%arg0: i32, %arg1: i32) -> (i32, i32) {
    %c0_i32 = arith.constant 0 : i32
    %c0_i32_0 = arith.constant 0 : i32
    return %arg0, %c0_i32 : i32, i32
  }
  func.func @transform_3(%arg0: i32, %arg1: i32) -> (i32, i32) {
    %c0_i32 = arith.constant 0 : i32
    %c0_i32_0 = arith.constant 0 : i32
    %c0_i32_1 = arith.constant 0 : i32
    return %c0_i32, %c0_i32_0 : i32, i32
  }
  func.func @transform_4(%arg0: i32, %arg1: i32) -> (i32, i32) {
    %c0_i32 = arith.constant 0 : i32
    %c0_i32_0 = arith.constant 0 : i32
    %c0_i32_1 = arith.constant 0 : i32
    return %c0_i32, %c0_i32_0 : i32, i32
  }
  func.func @transform_5(%arg0: i32, %arg1: i32) -> (i32, i32) {
    %c0_i32 = arith.constant 0 : i32
    %c0_i32_0 = arith.constant 0 : i32
    %c0_i32_1 = arith.constant 0 : i32
    return %c0_i32, %c0_i32_0 : i32, i32
  }
  func.func @transform_6(%arg0: i32, %arg1: i32) -> (i32, i32) {
    %c0_i32 = arith.constant 0 : i32
    %c0_i32_0 = arith.constant 0 : i32
    return %arg0, %c0_i32 : i32, i32
  }
}

module attributes {stable_mosaic.version = 11 : i64} {
  func.func @_gcn_kernel(%arg0: i32, %arg1: i32, %arg2: memref<8x8xbf16, #tpu.memory_space<vmem>>, %arg3: memref<8x128xbf16, #tpu.memory_space<vmem>>, %arg4: memref<8x128xf32, #tpu.memory_space<vmem>>, %arg5: memref<128x128xf32, #tpu.memory_space<vmem>>, %arg6: memref<1x128xf32, #tpu.memory_space<vmem>>, %arg7: memref<8x128xf32, #tpu.memory_space<vmem>>, %arg8: memref<8x128xf32, #tpu.memory_space<vmem>>) attributes {dimension_semantics = [#tpu.dimension_semantics<parallel>, #tpu.dimension_semantics<arbitrary>], iteration_bounds = array<i64: 1, 1>, scalar_prefetch = 0 : i64, scratch_operands = 1 : i64, tpu.core_type = #tpu.core_type<tc>, window_params = [{transform_indices = @transform_0, window_bounds = array<i64: 8, 8>}, {transform_indices = @transform_1, window_bounds = array<i64: 8, 128>}, {transform_indices = @transform_2, window_bounds = array<i64: 8, 128>}, {pipeline_mode = #tpu.pipeline_mode<synchronous>, transform_indices = @transform_3, window_bounds = array<i64: 128, 128>}, {pipeline_mode = #tpu.pipeline_mode<synchronous>, transform_indices = @transform_4, window_bounds = array<i64: 1, 128>}, {transform_indices = @transform_5, window_bounds = array<i64: 8, 128>}]} {
    %c0_i32 = arith.constant 0 : i32
    %0 = arith.cmpi eq, %arg1, %c0_i32 : i32
    %1 = arith.extui %0 : i1 to i32
    %c0_i32_0 = arith.constant 0 : i32
    %2 = arith.cmpi ne, %1, %c0_i32_0 : i32
    scf.if %2 {
      %c0_10 = arith.constant 0 : index
      %c0_11 = arith.constant 0 : index
      %12 = vector.load %arg4[%c0_10, %c0_11] : memref<8x128xf32, #tpu.memory_space<vmem>>, vector<8x128xf32>
      %c0_12 = arith.constant 0 : index
      %c0_13 = arith.constant 0 : index
      %13 = vector.load %arg5[%c0_12, %c0_13] : memref<128x128xf32, #tpu.memory_space<vmem>>, vector<128x128xf32>
      %cst_14 = arith.constant dense<0.000000e+00> : vector<8x128xf32>
      %14 = tpu.matmul %12, %13, %cst_14 {dimension_numbers = #tpu.dot_dimension_numbers<[1], [0], [0], [1], [0, 0, 1, 1], [], []>} : vector<8x128xf32>, vector<128x128xf32>, vector<8x128xf32> -> vector<8x128xf32>
      %c0_15 = arith.constant 0 : index
      %c0_16 = arith.constant 0 : index
      %15 = vector.load %arg6[%c0_15, %c0_16] : memref<1x128xf32, #tpu.memory_space<vmem>>, vector<1x128xf32>
      %16 = vector.broadcast %15 : vector<1x128xf32> to vector<8x128xf32>
      %17 = arith.addf %14, %16 : vector<8x128xf32>
      %c0_17 = arith.constant 0 : index
      %c0_18 = arith.constant 0 : index
      %18 = vector.load %arg8[%c0_17, %c0_18] : memref<8x128xf32, #tpu.memory_space<vmem>>, vector<8x128xf32>
      tpu.vector_store %arg8[%c0_17, %c0_18], %17 {strides = array<i32>} : memref<8x128xf32, #tpu.memory_space<vmem>>, vector<8x128xf32>,
    } else {
    }
    %c0 = arith.constant 0 : index
    %c0_1 = arith.constant 0 : index
    %3 = vector.load %arg8[%c0, %c0_1] : memref<8x128xf32, #tpu.memory_space<vmem>>, vector<8x128xf32>
    %c0_2 = arith.constant 0 : index
    %c0_3 = arith.constant 0 : index
    %4 = vector.load %arg2[%c0_2, %c0_3] : memref<8x8xbf16, #tpu.memory_space<vmem>>, vector<8x8xbf16>
    %c0_4 = arith.constant 0 : index
    %c0_5 = arith.constant 0 : index
    %5 = vector.load %arg3[%c0_4, %c0_5] : memref<8x128xbf16, #tpu.memory_space<vmem>>, vector<8x128xbf16>
    %cst = arith.constant dense<0.000000e+00> : vector<8x128xf32>
    %6 = tpu.matmul %4, %5, %cst {dimension_numbers = #tpu.dot_dimension_numbers<[1], [0], [0], [1], [0, 0, 1, 1], [], []>} : vector<8x8xbf16>, vector<8x128xbf16>, vector<8x128xf32> -> vector<8x128xf32>
    %7 = arith.addf %3, %6 : vector<8x128xf32>
    %c0_6 = arith.constant 0 : index
    %c0_7 = arith.constant 0 : index
    %8 = vector.load %arg8[%c0_6, %c0_7] : memref<8x128xf32, #tpu.memory_space<vmem>>, vector<8x128xf32>
    tpu.vector_store %arg8[%c0_6, %c0_7], %7 {strides = array<i32>} : memref<8x128xf32, #tpu.memory_space<vmem>>, vector<8x128xf32>,
    %c0_i32_8 = arith.constant 0 : i32
    %9 = arith.cmpi eq, %arg1, %c0_i32_8 : i32
    %10 = arith.extui %9 : i1 to i32
    %c0_i32_9 = arith.constant 0 : i32
    %11 = arith.cmpi ne, %10, %c0_i32_9 : i32
    scf.if %11 {
      %c0_10 = arith.constant 0 : index
      %c0_11 = arith.constant 0 : index
      %12 = vector.load %arg8[%c0_10, %c0_11] : memref<8x128xf32, #tpu.memory_space<vmem>>, vector<8x128xf32>
      %c0_12 = arith.constant 0 : index
      %c0_13 = arith.constant 0 : index
      %13 = vector.load %arg7[%c0_12, %c0_13] : memref<8x128xf32, #tpu.memory_space<vmem>>, vector<8x128xf32>
      tpu.vector_store %arg7[%c0_12, %c0_13], %12 {strides = array<i32>} : memref<8x128xf32, #tpu.memory_space<vmem>>, vector<8x128xf32>,
    } else {
    }
    return
  }
  func.func @transform_0(%arg0: i32, %arg1: i32) -> (i32, i32) {
    %c0_i32 = arith.constant 0 : i32
    return %arg0, %arg1 : i32, i32
  }
  func.func @transform_1(%arg0: i32, %arg1: i32) -> (i32, i32) {
    %c0_i32 = arith.constant 0 : i32
    %c0_i32_0 = arith.constant 0 : i32
    return %arg1, %c0_i32 : i32, i32
  }
  func.func @transform_2(%arg0: i32, %arg1: i32) -> (i32, i32) {
    %c0_i32 = arith.constant 0 : i32
    %c0_i32_0 = arith.constant 0 : i32
    return %arg0, %c0_i32 : i32, i32
  }
  func.func @transform_3(%arg0: i32, %arg1: i32) -> (i32, i32) {
    %c0_i32 = arith.constant 0 : i32
    %c0_i32_0 = arith.constant 0 : i32
    %c0_i32_1 = arith.constant 0 : i32
    return %c0_i32, %c0_i32_0 : i32, i32
  }
  func.func @transform_4(%arg0: i32, %arg1: i32) -> (i32, i32) {
    %c0_i32 = arith.constant 0 : i32
    %c0_i32_0 = arith.constant 0 : i32
    %c0_i32_1 = arith.constant 0 : i32
    return %c0_i32, %c0_i32_0 : i32, i32
  }
  func.func @transform_5(%arg0: i32, %arg1: i32) -> (i32, i32) {
    %c0_i32 = arith.constant 0 : i32
    %c0_i32_0 = arith.constant 0 : i32
    return %arg0, %c0_i32 : i32, i32
  }
}

</mosaic_0001>

<llo_original>
// kernel: net_forward.3
$region0: #{net_forward.3}
  #allocation0 [shape = 'u32[]', space=smem, size = 0x4, offset = 0x4, fixed_abs, tag = 'smem constant byte address 0x4 - core index']
  #allocation1 [shape = 'u32[72,128]{1,0:T(1,128)}', space=vmem, size = 0x9000, scoped, tag = 'internal scratch']
  %s0 = inlined_call_operand.hbm [shape: bf16[8,32], index: 0, kind: input, shape index: {}]
  %s1 = inlined_call_operand.hbm [shape: bf16[32,128], index: 1, kind: input, shape index: {}]
  %s2 = inlined_call_operand.vmem [shape: bf16[8,128], index: 2, kind: output, shape index: {}]
  %s3 = sld [smem:[#allocation0]]
  $region26: #{net_forward.3} parent=0
    _
  %s5 = ssub.s32 1, %s3
  %s6 = scalar_select 0, %s5, %s3
  $region1: #{net_forward.3} parent=0
    #allocation2 [shape = 'u8[2048]{0}', space=vmem, size = 0x800, scoped, tag = 'input window, operand 0, single buffered']
    #allocation3 [shape = 's32[1]{0}', space=sflag, size = 0x4, scoped, tag = 'scoped memory for net_forward.3']
    #allocation4 [shape = 'u8[8192]{0}', space=vmem, size = 0x2000, scoped, tag = 'input window, operand 1, single buffered']
    #allocation5 [shape = 's32[1]{0}', space=sflag, size = 0x4, scoped, tag = 'scoped memory for net_forward.3']
    %7 = vsyncpa [#allocation3], 0
    %8 = vsyncpa [#allocation5], 0
    // Predicated region
    $region2: #{net_forward.3} parent=1 // pred_check
      _
    $region3: #{net_forward.3} parent=1 // pred_check_branch
      %10 = sbr.rel (0) target = $region5
    $region4: #{net_forward.3} parent=1 // pred_region
      %12 = vsyncadd [#allocation3], 0
      %s14 = sshll.u32 %s0, 4
      %s15 = int_to_ptr.hbm [resolvable:$true] %s14
      %s16 = sshll.u32 [#allocation2], 4
      %s17 = int_to_ptr.vmem [resolvable:$true] %s16
      %19 = dma.hbm_to_vmem [thread:$0]  %s15, 64, %s17, [#allocation3]
    $region5: #{net_forward.3} parent=1 // pred_fallthru
      _
    // Predicated region
    $region6: #{net_forward.3} parent=1 // pred_check
      _
    $region7: #{net_forward.3} parent=1 // pred_check_branch
      %21 = sbr.rel (0) target = $region9
    $region8: #{net_forward.3} parent=1 // pred_region
      %23 = vsyncadd [#allocation5], 0
      %s24 = sshll.u32 %s1, 4
      %s25 = int_to_ptr.hbm [resolvable:$true] %s24
      %s26 = sshll.u32 [#allocation4], 4
      %s27 = int_to_ptr.vmem [resolvable:$true] %s26
      %32 = dma.hbm_to_vmem [thread:$0]  %s25, 256, %s27, [#allocation5], 64, 64, 4
    $region9: #{net_forward.3} parent=1 // pred_fallthru
      _
    // Predicated region
    $region10: #{net_forward.3} parent=1 // pred_check
      _
    $region11: #{net_forward.3} parent=1 // pred_check_branch
      %34 = sbr.rel (0) target = $region13
    $region12: #{net_forward.3} parent=1 // pred_region
      %36 = dma.done [#allocation3], 64
    $region13: #{net_forward.3} parent=1 // pred_fallthru
      _
    // Predicated region
    $region14: #{net_forward.3} parent=1 // pred_check
      _
    $region15: #{net_forward.3} parent=1 // pred_check_branch
      %38 = sbr.rel (0) target = $region17
    $region16: #{net_forward.3} parent=1 // pred_region
      %40 = dma.done [#allocation5], 256
    $region17: #{net_forward.3} parent=1 // pred_fallthru
      _
    %v42 = vld [vmem:[#allocation2] sm:$0xf]
    %v43 = vld [vmem:[#allocation4] sm:$0xf]
    %v44 = vld [vmem:[#allocation4 + $0x4] sm:$0xf]
    %v45 = vld [vmem:[#allocation4 + $0x8] sm:$0xf]
    %v46 = vld [vmem:[#allocation4 + $0xc] sm:$0xf]
    %v51 = vunpack.c.l.b16 %v43
    %v52 = vunpack.c.l.b16 %v44
    %v53 = vunpack.c.l.b16 %v45
    %v54 = vunpack.c.l.b16 %v46
    %v55 = vpack.c.b16 %v52, %v51
    %v56 = vpack.c.b16 %v54, %v53
    %vm59 = vcmask 261120
    %v61 = vsel %vm59, %v42, 0
    %63 = vmatpush.bf16.msra.mxu0 0
    %64 = vmatpush.bf16.msra.mxu0 0
    %65 = vmatpush.bf16.msra.mxu0 0
    %66 = vmatpush.bf16.msra.mxu0 0
    %67 = vmatpush.bf16.msra.mxu0 0
    %68 = vmatpush.bf16.msra.mxu0 0
    %69 = vmatpush.bf16.msra.mxu0 %v56
    %70 = vmatpush.bf16.msra.mxu0 %v55
    %71 = vmatmul.bf16.gmra.mxu0 %v61
    %v72 = vpop.f32.mrf.mxu0
    %v73 = vadd.f32 0.0, %v72
    %v74 = vpop.f32.mrf.mxu0
    %75 = vdwg.mxu0
    %v76 = vpack.c.bf16 %v73, %v73
    %77 = vst [vmem:[%s2] sm:$0xf] %v76
    // Predicated region
    $region18: #{net_forward.3} parent=1 // pred_check
      _
    $region19: #{net_forward.3} parent=1 // pred_check_branch
      %79 = sbr.rel (0) target = $region21
    $region20: #{net_forward.3} parent=1 // pred_region
      _
    $region21: #{net_forward.3} parent=1 // pred_fallthru
      _
    // Predicated region
    $region22: #{net_forward.3} parent=1 // pred_check
      _
    $region23: #{net_forward.3} parent=1 // pred_check_branch
      %81 = sbr.rel (0) target = $region25
    $region24: #{net_forward.3} parent=1 // pred_region
      _
    $region25: #{net_forward.3} parent=1 // pred_fallthru
      _
    %82 = vsyncpa [#allocation3], 1
    %83 = vsyncpa [#allocation5], 1

// kernel: net_forward.5
$region0: #{net_forward.5}
  #allocation0 [shape = 'u32[]', space=smem, size = 0x4, offset = 0x4, fixed_abs, tag = 'smem constant byte address 0x4 - core index']
  #allocation1 [shape = 'u32[72,128]{1,0:T(1,128)}', space=vmem, size = 0x9000, scoped, tag = 'internal scratch']
  #allocation2 [shape = 'f32[8,128]{1,0:T(8,128)}', space=vmem, size = 0x1000, scoped, tag = 'scratch operand']
  %s0 = inlined_call_operand.hbm [shape: bf16[8,8], index: 0, kind: input, shape index: {}]
  %s1 = inlined_call_operand.vmem [shape: bf16[8,128], index: 1, kind: input, shape index: {}]
  %s2 = inlined_call_operand.vmem [shape: f32[8,128], index: 2, kind: input, shape index: {}]
  %s3 = inlined_call_operand.hbm [shape: f32[128,128], index: 3, kind: input, shape index: {}]
  %s4 = inlined_call_operand.vmem [shape: f32[1,128], index: 4, kind: input, shape index: {}]
  %s5 = inlined_call_operand.vmem [shape: f32[8,128], index: 5, kind: output, shape index: {}]
  %s6 = sld [smem:[#allocation0]]
  $region46: #{net_forward.5} parent=0
    _
  %s8 = ssub.s32 1, %s6
  %s9 = scalar_select 0, %s8, %s6
  $region1: #{net_forward.5} parent=0
    #allocation3 [shape = 'u8[2048]{0}', space=vmem, size = 0x800, scoped, tag = 'input window, operand 0, single buffered']
    #allocation4 [shape = 's32[1]{0}', space=sflag, size = 0x4, scoped, tag = 'scoped memory for net_forward.5']
    #allocation5 [shape = 'u8[65536]{0}', space=vmem, size = 0x10000, scoped, tag = 'input window, operand 3, single buffered']
    #allocation6 [shape = 's32[1]{0}', space=sflag, size = 0x4, scoped, tag = 'scoped memory for net_forward.5']
    %10 = vsyncpa [#allocation4], 0
    %11 = vsyncpa [#allocation6], 0
    // Predicated region
    $region2: #{net_forward.5} parent=1 // pred_check
      _
    $region3: #{net_forward.5} parent=1 // pred_check_branch
      %13 = sbr.rel (0) target = $region5
    $region4: #{net_forward.5} parent=1 // pred_region
      %15 = vsyncadd [#allocation4], 0
      %s17 = sshll.u32 %s0, 4
      %s18 = int_to_ptr.hbm [resolvable:$true] %s17
      %s19 = sshll.u32 [#allocation3], 4
      %s20 = int_to_ptr.vmem [resolvable:$true] %s19
      %22 = dma.hbm_to_vmem [thread:$0]  %s18, 64, %s20, [#allocation4]
    $region5: #{net_forward.5} parent=1 // pred_fallthru
      _
    // Predicated region
    $region6: #{net_forward.5} parent=1 // pred_check
      _
    $region7: #{net_forward.5} parent=1 // pred_check_branch
      %24 = sbr.rel (0) target = $region9
    $region8: #{net_forward.5} parent=1 // pred_region
      _
    $region9: #{net_forward.5} parent=1 // pred_fallthru
      _
    // Predicated region
    $region10: #{net_forward.5} parent=1 // pred_check
      _
    $region11: #{net_forward.5} parent=1 // pred_check_branch
      %26 = sbr.rel (0) target = $region13
    $region12: #{net_forward.5} parent=1 // pred_region
      _
    $region13: #{net_forward.5} parent=1 // pred_fallthru
      _
    // Predicated region
    $region14: #{net_forward.5} parent=1 // pred_check
      _
    $region15: #{net_forward.5} parent=1 // pred_check_branch
      %28 = sbr.rel (0) target = $region17
    $region16: #{net_forward.5} parent=1 // pred_region
      %30 = vsyncadd [#allocation6], 0
      %s31 = sshll.u32 %s3, 4
      %s32 = int_to_ptr.hbm [resolvable:$true] %s31
      %s33 = sshll.u32 [#allocation5], 4
      %s34 = int_to_ptr.vmem [resolvable:$true] %s33
      %39 = dma.hbm_to_vmem [thread:$0]  %s32, 2048, %s34, [#allocation6], 128, 128, 8
    $region17: #{net_forward.5} parent=1 // pred_fallthru
      _
    // Predicated region
    $region18: #{net_forward.5} parent=1 // pred_check
      _
    $region19: #{net_forward.5} parent=1 // pred_check_branch
      %41 = sbr.rel (0) target = $region21
    $region20: #{net_forward.5} parent=1 // pred_region
      _
    $region21: #{net_forward.5} parent=1 // pred_fallthru
      _
    // Predicated region
    $region22: #{net_forward.5} parent=1 // pred_check
      _
    $region23: #{net_forward.5} parent=1 // pred_check_branch
      %43 = sbr.rel (0) target = $region25
    $region24: #{net_forward.5} parent=1 // pred_region
      %45 = dma.done [#allocation4], 64
    $region25: #{net_forward.5} parent=1 // pred_fallthru
      _
    // Predicated region
    $region26: #{net_forward.5} parent=1 // pred_check
      _
    $region27: #{net_forward.5} parent=1 // pred_check_branch
      %47 = sbr.rel (0) target = $region29
    $region28: #{net_forward.5} parent=1 // pred_region
      %49 = dma.done [#allocation6], 2048
    $region29: #{net_forward.5} parent=1 // pred_fallthru
      _
    %p51 = scmp.eq.s32.totalorder 0, 0
    // Predicated region
    $region30: #{net_forward.5} parent=1 // pred_check
      %p52 = pneg %p51
    $region31: #{net_forward.5} parent=1 // pred_check_branch
      %54 = sbr.rel (%p52) target = $region33
    $region32: #{net_forward.5} parent=1 // pred_region
      %v55 = vld [vmem:[%s2] sm:$0xff]
      %v56 = vld [vmem:[#allocation5] sm:$0xff]
      %v57 = vld [vmem:[#allocation5 + $0x8] sm:$0xff]
      %v58 = vld [vmem:[#allocation5 + $0x10] sm:$0xff]
      %v59 = vld [vmem:[#allocation5 + $0x18] sm:$0xff]
      %v60 = vld [vmem:[#allocation5 + $0x20] sm:$0xff]
      %v61 = vld [vmem:[#allocation5 + $0x28] sm:$0xff]
      %v62 = vld [vmem:[#allocation5 + $0x30] sm:$0xff]
      %v63 = vld [vmem:[#allocation5 + $0x38] sm:$0xff]
      %v64 = vld [vmem:[#allocation5 + $0x40] sm:$0xff]
      %v65 = vld [vmem:[#allocation5 + $0x48] sm:$0xff]
      %v66 = vld [vmem:[#allocation5 + $0x50] sm:$0xff]
      %v67 = vld [vmem:[#allocation5 + $0x58] sm:$0xff]
      %v68 = vld [vmem:[#allocation5 + $0x60] sm:$0xff]
      %v69 = vld [vmem:[#allocation5 + $0x68] sm:$0xff]
      %v70 = vld [vmem:[#allocation5 + $0x70] sm:$0xff]
      %v71 = vld [vmem:[#allocation5 + $0x78] sm:$0xff]
      %v72 = vld [vmem:[%s4] sm:$0x1]
      %v74 = vperm.slane %v72, 0
      %76 = vmatpush.msra.mxu0 %v71
      %77 = vmatpush.msra.mxu0 %v70
      %78 = vmatpush.msra.mxu0 %v69
      %79 = vmatpush.msra.mxu0 %v68
      %80 = vmatpush.msra.mxu0 %v67
      %81 = vmatpush.msra.mxu0 %v66
      %82 = vmatpush.msra.mxu0 %v65
      %83 = vmatpush.msra.mxu0 %v64
      %84 = vmatpush.msra.mxu0 %v63
      %85 = vmatpush.msra.mxu0 %v62
      %86 = vmatpush.msra.mxu0 %v61
      %87 = vmatpush.msra.mxu0 %v60
      %88 = vmatpush.msra.mxu0 %v59
      %89 = vmatpush.msra.mxu0 %v58
      %90 = vmatpush.msra.mxu0 %v57
      %91 = vmatpush.msra.mxu0 %v56
      %92 = vmatmul.f32.gmra.mxu0 %v55
      %v93 = vpop.f32.mrf.mxu0
      %v94 = vadd.f32 %v74, %v93
      %95 = vdwg.mxu0
      %96 = vst [vmem:[#allocation2] sm:$0xff] %v94
    $region33: #{net_forward.5} parent=1 // pred_fallthru
      _
    %v97 = vld [vmem:[#allocation2] sm:$0xff]
    %v98 = vld [vmem:[#allocation3] sm:$0xf]
    %v99 = vld [vmem:[%s1] sm:$0xf]
    %vm100 = vcmask 64512
    %v102 = vsel %vm100, %v98, 0
    %vm104 = vcmask 1043456
    %v106 = vsel %vm104, %v99, 0
    %108 = vmatpush.bf16.msra.mxu0 0
    %109 = vmatpush.bf16.msra.mxu0 0
    %110 = vmatpush.bf16.msra.mxu0 0
    %111 = vmatpush.bf16.msra.mxu0 0
    %112 = vmatpush.bf16.msra.mxu0 0
    %113 = vmatpush.bf16.msra.mxu0 0
    %114 = vmatpush.bf16.msra.mxu0 0
    %115 = vmatpush.bf16.msra.mxu0 %v106
    %116 = vmatmul.bf16.gmra.mxu0 %v102
    %v117 = vpop.f32.mrf.mxu0
    %v118 = vadd.f32 0.0, %v117
    %v119 = vpop.f32.mrf.mxu0
    %120 = vdwg.mxu0
    %v121 = vadd.f32 %v97, %v118
    %122 = vst [vmem:[#allocation2] sm:$0xff] %v121
    // Predicated region
    $region34: #{net_forward.5} parent=1 // pred_check
      %p123 = pneg %p51
    $region35: #{net_forward.5} parent=1 // pred_check_branch
      %125 = sbr.rel (%p123) target = $region37
    $region36: #{net_forward.5} parent=1 // pred_region
      %v126 = vld [vmem:[#allocation2] sm:$0xff]
      %127 = vst [vmem:[%s5] sm:$0xff] %v126
    $region37: #{net_forward.5} parent=1 // pred_fallthru
      _
    // Predicated region
    $region38: #{net_forward.5} parent=1 // pred_check
      _
    $region39: #{net_forward.5} parent=1 // pred_check_branch
      %129 = sbr.rel (0) target = $region41
    $region40: #{net_forward.5} parent=1 // pred_region
      _
    $region41: #{net_forward.5} parent=1 // pred_fallthru
      _
    // Predicated region
    $region42: #{net_forward.5} parent=1 // pred_check
      _
    $region43: #{net_forward.5} parent=1 // pred_check_branch
      %131 = sbr.rel (0) target = $region45
    $region44: #{net_forward.5} parent=1 // pred_region
      _
    $region45: #{net_forward.5} parent=1 // pred_fallthru
      _
    %132 = vsyncpa [#allocation4], 1
    %133 = vsyncpa [#allocation6], 1

// kernel: net_forward.4
$region0: #{net_forward.4}
  #allocation0 [shape = 'u32[]', space=smem, size = 0x4, offset = 0x4, fixed_abs, tag = 'smem constant byte address 0x4 - core index']
  #allocation1 [shape = 'u32[72,128]{1,0:T(1,128)}', space=vmem, size = 0x9000, scoped, tag = 'internal scratch']
  #allocation2 [shape = 'f32[8,128]{1,0:T(8,128)}', space=vmem, size = 0x1000, scoped, tag = 'scratch operand']
  %s0 = inlined_call_operand.hbm [shape: bf16[8,8], index: 0, kind: input, shape index: {}]
  %s1 = inlined_call_operand.vmem [shape: bf16[8,128], index: 1, kind: input, shape index: {}]
  %s2 = inlined_call_operand.vmem [shape: f32[8,128], index: 2, kind: input, shape index: {}]
  %s3 = inlined_call_operand.hbm [shape: f32[128,128], index: 3, kind: input, shape index: {}]
  %s4 = inlined_call_operand.hbm [shape: f32[1,128], index: 4, kind: input, shape index: {}]
  %s5 = inlined_call_operand.hbm [shape: bf16[128,128], index: 5, kind: input, shape index: {}]
  %s6 = inlined_call_operand.vmem [shape: bf16[8,128], index: 6, kind: output, shape index: {}]
  %s7 = sld [smem:[#allocation0]]
  $region58: #{net_forward.4} parent=0
    _
  %s9 = ssub.s32 1, %s7
  %s10 = scalar_select 0, %s9, %s7
  $region1: #{net_forward.4} parent=0
    #allocation3 [shape = 'u8[2048]{0}', space=vmem, size = 0x800, scoped, tag = 'input window, operand 0, single buffered']
    #allocation4 [shape = 's32[1]{0}', space=sflag, size = 0x4, scoped, tag = 'scoped memory for net_forward.4']
    #allocation5 [shape = 'u8[65536]{0}', space=vmem, size = 0x10000, scoped, tag = 'input window, operand 3, single buffered']
    #allocation6 [shape = 's32[1]{0}', space=sflag, size = 0x4, scoped, tag = 'scoped memory for net_forward.4']
    #allocation7 [shape = 'u8[512]{0}', space=vmem, size = 0x400, scoped, tag = 'input window, operand 4, single buffered']
    #allocation8 [shape = 'u8[32768]{0}', space=vmem, size = 0x8000, scoped, tag = 'input window, operand 5, single buffered']
    #allocation9 [shape = 's32[1]{0}', space=sflag, size = 0x4, scoped, tag = 'scoped memory for net_forward.4']
    %11 = vsyncpa [#allocation4], 0
    %12 = vsyncpa [#allocation6], 0
    %13 = vsyncpa [#allocation9], 0
    // Predicated region
    $region2: #{net_forward.4} parent=1 // pred_check
      _
    $region3: #{net_forward.4} parent=1 // pred_check_branch
      %15 = sbr.rel (0) target = $region5
    $region4: #{net_forward.4} parent=1 // pred_region
      %17 = vsyncadd [#allocation4], 0
      %s19 = sshll.u32 %s0, 4
      %s20 = int_to_ptr.hbm [resolvable:$true] %s19
      %s21 = sshll.u32 [#allocation3], 4
      %s22 = int_to_ptr.vmem [resolvable:$true] %s21
      %24 = dma.hbm_to_vmem [thread:$0]  %s20, 64, %s22, [#allocation4]
    $region5: #{net_forward.4} parent=1 // pred_fallthru
      _
    // Predicated region
    $region6: #{net_forward.4} parent=1 // pred_check
      _
    $region7: #{net_forward.4} parent=1 // pred_check_branch
      %26 = sbr.rel (0) target = $region9
    $region8: #{net_forward.4} parent=1 // pred_region
      _
    $region9: #{net_forward.4} parent=1 // pred_fallthru
      _
    // Predicated region
    $region10: #{net_forward.4} parent=1 // pred_check
      _
    $region11: #{net_forward.4} parent=1 // pred_check_branch
      %28 = sbr.rel (0) target = $region13
    $region12: #{net_forward.4} parent=1 // pred_region
      _
    $region13: #{net_forward.4} parent=1 // pred_fallthru
      _
    // Predicated region
    $region14: #{net_forward.4} parent=1 // pred_check
      _
    $region15: #{net_forward.4} parent=1 // pred_check_branch
      %30 = sbr.rel (0) target = $region17
    $region16: #{net_forward.4} parent=1 // pred_region
      %32 = vsyncadd [#allocation6], 0
      %s33 = sshll.u32 %s3, 4
      %s34 = int_to_ptr.hbm [resolvable:$true] %s33
      %s35 = sshll.u32 [#allocation5], 4
      %s36 = int_to_ptr.vmem [resolvable:$true] %s35
      %41 = dma.hbm_to_vmem [thread:$0]  %s34, 2048, %s36, [#allocation6], 128, 128, 8
    $region17: #{net_forward.4} parent=1 // pred_fallthru
      _
    // Predicated region
    $region18: #{net_forward.4} parent=1 // pred_check
      _
    $region19: #{net_forward.4} parent=1 // pred_check_branch
      %43 = sbr.rel (0) target = $region21
    $region20: #{net_forward.4} parent=1 // pred_region
      %45 = vsyncadd [#allocation6], 0
      %s47 = sshll.u32 %s4, 4
      %s48 = int_to_ptr.hbm [resolvable:$true] %s47
      %s49 = sshll.u32 [#allocation7], 4
      %s50 = int_to_ptr.vmem [resolvable:$true] %s49
      %52 = dma.hbm_to_vmem [thread:$0]  %s48, 16, %s50, [#allocation6]
    $region21: #{net_forward.4} parent=1 // pred_fallthru
      _
    // Predicated region
    $region22: #{net_forward.4} parent=1 // pred_check
      _
    $region23: #{net_forward.4} parent=1 // pred_check_branch
      %54 = sbr.rel (0) target = $region25
    $region24: #{net_forward.4} parent=1 // pred_region
      %56 = vsyncadd [#allocation9], 0
      %s57 = sshll.u32 %s5, 4
      %s58 = int_to_ptr.hbm [resolvable:$true] %s57
      %s59 = sshll.u32 [#allocation8], 4
      %s60 = int_to_ptr.vmem [resolvable:$true] %s59
      %65 = dma.hbm_to_vmem [thread:$0]  %s58, 1024, %s60, [#allocation9], 64, 64, 4
    $region25: #{net_forward.4} parent=1 // pred_fallthru
      _
    // Predicated region
    $region26: #{net_forward.4} parent=1 // pred_check
      _
    $region27: #{net_forward.4} parent=1 // pred_check_branch
      %67 = sbr.rel (0) target = $region29
    $region28: #{net_forward.4} parent=1 // pred_region
      %69 = dma.done [#allocation4], 64
    $region29: #{net_forward.4} parent=1 // pred_fallthru
      _
    // Predicated region
    $region30: #{net_forward.4} parent=1 // pred_check
      _
    $region31: #{net_forward.4} parent=1 // pred_check_branch
      %71 = sbr.rel (0) target = $region33
    $region32: #{net_forward.4} parent=1 // pred_region
      %73 = dma.done [#allocation6], 2048
    $region33: #{net_forward.4} parent=1 // pred_fallthru
      _
    // Predicated region
    $region34: #{net_forward.4} parent=1 // pred_check
      _
    $region35: #{net_forward.4} parent=1 // pred_check_branch
      %75 = sbr.rel (0) target = $region37
    $region36: #{net_forward.4} parent=1 // pred_region
      %77 = dma.done [#allocation6], 16
    $region37: #{net_forward.4} parent=1 // pred_fallthru
      _
    // Predicated region
    $region38: #{net_forward.4} parent=1 // pred_check
      _
    $region39: #{net_forward.4} parent=1 // pred_check_branch
      %79 = sbr.rel (0) target = $region41
    $region40: #{net_forward.4} parent=1 // pred_region
      %81 = dma.done [#allocation9], 1024
    $region41: #{net_forward.4} parent=1 // pred_fallthru
      _
    %p83 = scmp.eq.s32.totalorder 0, 0
    // Predicated region
    $region42: #{net_forward.4} parent=1 // pred_check
      %p84 = pneg %p83
    $region43: #{net_forward.4} parent=1 // pred_check_branch
      %86 = sbr.rel (%p84) target = $region45
    $region44: #{net_forward.4} parent=1 // pred_region
      %v87 = vld [vmem:[%s2] sm:$0xff]
      %v88 = vld [vmem:[#allocation5] sm:$0xff]
      %v89 = vld [vmem:[#allocation5 + $0x8] sm:$0xff]
      %v90 = vld [vmem:[#allocation5 + $0x10] sm:$0xff]
      %v91 = vld [vmem:[#allocation5 + $0x18] sm:$0xff]
      %v92 = vld [vmem:[#allocation5 + $0x20] sm:$0xff]
      %v93 = vld [vmem:[#allocation5 + $0x28] sm:$0xff]
      %v94 = vld [vmem:[#allocation5 + $0x30] sm:$0xff]
      %v95 = vld [vmem:[#allocation5 + $0x38] sm:$0xff]
      %v96 = vld [vmem:[#allocation5 + $0x40] sm:$0xff]
      %v97 = vld [vmem:[#allocation5 + $0x48] sm:$0xff]
      %v98 = vld [vmem:[#allocation5 + $0x50] sm:$0xff]
      %v99 = vld [vmem:[#allocation5 + $0x58] sm:$0xff]
      %v100 = vld [vmem:[#allocation5 + $0x60] sm:$0xff]
      %v101 = vld [vmem:[#allocation5 + $0x68] sm:$0xff]
      %v102 = vld [vmem:[#allocation5 + $0x70] sm:$0xff]
      %v103 = vld [vmem:[#allocation5 + $0x78] sm:$0xff]
      %v104 = vld [vmem:[#allocation7] sm:$0x1]
      %v106 = vperm.slane %v104, 0
      %108 = vmatpush.msra.mxu0 %v103
      %109 = vmatpush.msra.mxu0 %v102
      %110 = vmatpush.msra.mxu0 %v101
      %111 = vmatpush.msra.mxu0 %v100
      %112 = vmatpush.msra.mxu0 %v99
      %113 = vmatpush.msra.mxu0 %v98
      %114 = vmatpush.msra.mxu0 %v97
      %115 = vmatpush.msra.mxu0 %v96
      %116 = vmatpush.msra.mxu0 %v95
      %117 = vmatpush.msra.mxu0 %v94
      %118 = vmatpush.msra.mxu0 %v93
      %119 = vmatpush.msra.mxu0 %v92
      %120 = vmatpush.msra.mxu0 %v91
      %121 = vmatpush.msra.mxu0 %v90
      %122 = vmatpush.msra.mxu0 %v89
      %123 = vmatpush.msra.mxu0 %v88
      %124 = vmatmul.f32.gmra.mxu0 %v87
      %v125 = vpop.f32.mrf.mxu0
      %v126 = vadd.f32 %v106, %v125
      %127 = vdwg.mxu0
      %128 = vst [vmem:[#allocation2] sm:$0xff] %v126
    $region45: #{net_forward.4} parent=1 // pred_fallthru
      _
    %v129 = vld [vmem:[#allocation2] sm:$0xff]
    %v130 = vld [vmem:[#allocation3] sm:$0xf]
    %v131 = vld [vmem:[%s1] sm:$0xf]
    %vm132 = vcmask 64512
    %v134 = vsel %vm132, %v130, 0
    %vm136 = vcmask 1043456
    %v138 = vsel %vm136, %v131, 0
    %140 = vmatpush.bf16.msra.mxu0 0
    %141 = vmatpush.bf16.msra.mxu0 0
    %142 = vmatpush.bf16.msra.mxu0 0
    %143 = vmatpush.bf16.msra.mxu0 0
    %144 = vmatpush.bf16.msra.mxu0 0
    %145 = vmatpush.bf16.msra.mxu0 0
    %146 = vmatpush.bf16.msra.mxu0 0
    %147 = vmatpush.bf16.msra.mxu0 %v138
    %148 = vmatmul.bf16.gmra.mxu0 %v134
    %v149 = vpop.f32.mrf.mxu0
    %v150 = vadd.f32 0.0, %v149
    %v151 = vpop.f32.mrf.mxu0
    %152 = vdwg.mxu0
    %v153 = vadd.f32 %v129, %v150
    %154 = vst [vmem:[#allocation2] sm:$0xff] %v153
    // Predicated region
    $region46: #{net_forward.4} parent=1 // pred_check
      %p155 = pneg %p83
    $region47: #{net_forward.4} parent=1 // pred_check_branch
      %157 = sbr.rel (%p155) target = $region49
    $region48: #{net_forward.4} parent=1 // pred_region
      %v158 = vld [vmem:[#allocation2] sm:$0xff]
      %v159 = vmax.f32 %v158, 0.0
      %v160 = vpack.c.bf16 %v159, %v159
      %v161 = vld [vmem:[#allocation8] sm:$0xf]
      %v162 = vld [vmem:[#allocation8 + $0x4] sm:$0xf]
      %v163 = vld [vmem:[#allocation8 + $0x8] sm:$0xf]
      %v164 = vld [vmem:[#allocation8 + $0xc] sm:$0xf]
      %v165 = vld [vmem:[#allocation8 + $0x10] sm:$0xf]
      %v166 = vld [vmem:[#allocation8 + $0x14] sm:$0xf]
      %v167 = vld [vmem:[#allocation8 + $0x18] sm:$0xf]
      %v168 = vld [vmem:[#allocation8 + $0x1c] sm:$0xf]
      %v169 = vld [vmem:[#allocation8 + $0x20] sm:$0xf]
      %v170 = vld [vmem:[#allocation8 + $0x24] sm:$0xf]
      %v171 = vld [vmem:[#allocation8 + $0x28] sm:$0xf]
      %v172 = vld [vmem:[#allocation8 + $0x2c] sm:$0xf]
      %v173 = vld [vmem:[#allocation8 + $0x30] sm:$0xf]
      %v174 = vld [vmem:[#allocation8 + $0x34] sm:$0xf]
      %v175 = vld [vmem:[#allocation8 + $0x38] sm:$0xf]
      %v176 = vld [vmem:[#allocation8 + $0x3c] sm:$0xf]
      %v193 = vunpack.c.l.b16 %v161
      %v194 = vunpack.c.l.b16 %v162
      %v195 = vunpack.c.l.b16 %v163
      %v196 = vunpack.c.l.b16 %v164
      %v197 = vunpack.c.l.b16 %v165
      %v198 = vunpack.c.l.b16 %v166
      %v199 = vunpack.c.l.b16 %v167
      %v200 = vunpack.c.l.b16 %v168
      %v201 = vunpack.c.l.b16 %v169
      %v202 = vunpack.c.l.b16 %v170
      %v203 = vunpack.c.l.b16 %v171
      %v204 = vunpack.c.l.b16 %v172
      %v205 = vunpack.c.l.b16 %v173
      %v206 = vunpack.c.l.b16 %v174
      %v207 = vunpack.c.l.b16 %v175
      %v208 = vunpack.c.l.b16 %v176
      %v209 = vpack.c.b16 %v194, %v193
      %v210 = vpack.c.b16 %v196, %v195
      %v211 = vpack.c.b16 %v198, %v197
      %v212 = vpack.c.b16 %v200, %v199
      %v213 = vpack.c.b16 %v202, %v201
      %v214 = vpack.c.b16 %v204, %v203
      %v215 = vpack.c.b16 %v206, %v205
      %v216 = vpack.c.b16 %v208, %v207
      %225 = vmatpush.bf16.msra.mxu0 %v216
      %226 = vmatpush.bf16.msra.mxu0 %v215
      %227 = vmatpush.bf16.msra.mxu0 %v214
      %228 = vmatpush.bf16.msra.mxu0 %v213
      %229 = vmatpush.bf16.msra.mxu0 %v212
      %230 = vmatpush.bf16.msra.mxu0 %v211
      %231 = vmatpush.bf16.msra.mxu0 %v210
      %232 = vmatpush.bf16.msra.mxu0 %v209
      %233 = vmatmul.bf16.gmra.mxu0 %v160
      %v234 = vpop.f32.mrf.mxu0
      %v235 = vadd.f32 0.0, %v234
      %v236 = vpop.f32.mrf.mxu0
      %237 = vdwg.mxu0
      %v238 = vpack.c.bf16 %v235, %v235
      %239 = vst [vmem:[%s6] sm:$0xf] %v238
    $region49: #{net_forward.4} parent=1 // pred_fallthru
      _
    // Predicated region
    $region50: #{net_forward.4} parent=1 // pred_check
      _
    $region51: #{net_forward.4} parent=1 // pred_check_branch
      %241 = sbr.rel (0) target = $region53
    $region52: #{net_forward.4} parent=1 // pred_region
      _
    $region53: #{net_forward.4} parent=1 // pred_fallthru
      _
    // Predicated region
    $region54: #{net_forward.4} parent=1 // pred_check
      _
    $region55: #{net_forward.4} parent=1 // pred_check_branch
      %243 = sbr.rel (0) target = $region57
    $region56: #{net_forward.4} parent=1 // pred_region
      _
    $region57: #{net_forward.4} parent=1 // pred_fallthru
      _
    %244 = vsyncpa [#allocation4], 1
    %245 = vsyncpa [#allocation6], 1
    %246 = vsyncpa [#allocation9], 1

</llo_original>
